<compile_context>
chip_gen: v7x
topology: tpu7x:2x2x1
jax: 0.10.0
libtpu: 0.0.40
codegen_flags: <defaults>
</compile_context>

<pallas_src>
import functools
import math

import jax
import jax.numpy as jnp
from jax.experimental import pallas as pl
from jax.experimental.pallas import tpu as pltpu

LEAKY_SLOPE = 0.01  # torch F.leaky_relu default


def _gat_project_kernel(h_ref, w_ref, asrc_ref, adst_ref, z_ref, s_ref, d_ref):
    """One-shot prologue: z = h @ W for all heads + per-head src/dst logits."""
    z = jnp.dot(h_ref[...], w_ref[...], preferred_element_type=jnp.float32)   # (N, H*D)
    z_ref[...] = z
    # attn_fc(concat(z_src, z_dst)) = z @ a_src + z @ a_dst via block-diagonal weights.
    s_ref[...] = jnp.dot(z, asrc_ref[...], preferred_element_type=jnp.float32)  # (N, H)
    d_ref[...] = jnp.dot(z, adst_ref[...], preferred_element_type=jnp.float32)  # (N, H)


def _gat_attend_kernel(z_ref, st_ref, d_ref, bias_ref, out_ref, *,
                       num_heads, out_dim, mxu_dtype):
    """Per dst-row-tile masked softmax + alpha @ z, all heads."""
    bias = bias_ref[...].astype(jnp.float32)          # (TM, N) additive mask (0 / -1e30)
    # TODO(synk): for large TM*N switch this static unroll to lax.fori_loop with a VMEM
    #             accumulator (bound live ranges) and flash-tile the src axis.
    for hd in range(num_heads):
        d = d_ref[:, hd:hd + 1]                       # (TM, 1) dst term
        s = st_ref[hd:hd + 1, :]                      # (1, N)  src term
        e = d + s                                     # (TM, N) raw logits
        e = jnp.where(e > 0, e, LEAKY_SLOPE * e)      # leaky_relu
        e = e + bias                                  # masked edges -> ~-1e30
        m = jnp.max(e, axis=1, keepdims=True)
        p = jnp.exp(e - m)                            # masked edges underflow to 0
        l = jnp.sum(p, axis=1, keepdims=True)
        alpha = p * (1.0 / l)                         # exact reciprocal (correctness)
        z_h = z_ref[:, hd * out_dim:(hd + 1) * out_dim]                 # (N, D)
        # Write straight into the (TM, H*D) output block; HBM writeback is one
        # lane-dense 128-wide block per grid step.
        out_ref[:, hd * out_dim:(hd + 1) * out_dim] = jnp.dot(
            alpha.astype(mxu_dtype), z_h.astype(mxu_dtype),
            preferred_element_type=jnp.float32)


def multi_head_gat(h, W, A, adj, *, merge="cat", block_rows=512,
                   mxu_dtype=jnp.bfloat16):
    """Pallas implementation of MultiHeadGATLayer.forward (dense adjacency).

    h   : (N, in_dim) f32       node features
    W   : (H, in_dim, out_dim)  per-head fc weight (z = h @ W[hd])
    A   : (H, 1, 2*out_dim)     per-head attn_fc weight
    adj : (N, N) f32            adj[dst, src] > 0 iff edge src->dst
    """
    N, in_dim = h.shape
    H, _, D = W.shape
    HD = H * D

    # --- one-off wrapper-side parameter repacking (tiny) ---
    W_flat = jnp.transpose(W, (1, 0, 2)).reshape(in_dim, HD)        # z_all = h @ W_flat
    a_src = A[:, 0, :D]                                             # (H, D)
    a_dst = A[:, 0, D:]                                             # (H, D)
    eye = jnp.eye(H, dtype=jnp.float32)
    A_src_blk = (a_src[:, :, None] * eye[:, None, :]).reshape(HD, H).astype(jnp.float32)
    A_dst_blk = (a_dst[:, :, None] * eye[:, None, :]).reshape(HD, H).astype(jnp.float32)

    # Additive softmax bias replaces the 0/1 adjacency (bf16 halves the only O(N^2)
    # stream; exact: exp(-1e30 - m) == 0 in f32, 0-bias rows are untouched).
    bias = jnp.where(adj > 0, 0.0, -1e30).astype(jnp.bfloat16)

    h_in = h.astype(mxu_dtype)
    w_in = W_flat.astype(mxu_dtype)

    vmem = pl.BlockSpec(memory_space=pltpu.MemorySpace.VMEM)

    # --- prologue kernel: computed ONCE, reused by every grid step below ---
    z_all, s_all, d_all = pl.pallas_call(
        _gat_project_kernel,
        out_shape=(jax.ShapeDtypeStruct((N, HD), jnp.float32),
                   jax.ShapeDtypeStruct((N, H), jnp.float32),
                   jax.ShapeDtypeStruct((N, H), jnp.float32)),
        in_specs=[vmem, vmem, vmem, vmem],
        out_specs=(vmem, vmem, vmem),
    )(h_in, w_in, A_src_blk, A_dst_blk)

    # Layout plumbing: present the per-head src term as a lane-dense (1, N) row.
    s_t = jnp.transpose(s_all)                                      # (H, N)

    # --- main kernel: grid over destination-row tiles ---
    TM = int(min(block_rows, N))
    # TODO(synk): on v7x (64 MiB VMEM) prefer block_rows <= 256 at large N, or shrink
    #             further with a bf16 logit path (v6e/v7x only).
    grid = (pl.cdiv(N, TM),)

    # VMEM budget: resident z/s_t + double-buffered d/bias/out blocks + f32 temporaries.
    resident = N * HD * 4 + H * N * 4
    per_step = TM * H * 4 + TM * N * bias.dtype.itemsize + TM * HD * 4
    temps = 4 * TM * N * 4
    vmem_limit = int(min(max((resident + 2 * per_step + temps) * 3 // 2,
                             8 * 1024 * 1024), 64 * 1024 * 1024))

    out = pl.pallas_call(
        functools.partial(_gat_attend_kernel, num_heads=H, out_dim=D,
                          mxu_dtype=mxu_dtype),
        out_shape=jax.ShapeDtypeStruct((N, HD), jnp.float32),
        grid_spec=pltpu.PrefetchScalarGridSpec(
            num_scalar_prefetch=0,
            grid=grid,
            in_specs=[
                vmem,                                            # z_all: full, resident
                vmem,                                            # s_t  : full, resident
                pl.BlockSpec((TM, H), lambda i: (i, 0)),         # d tile
                pl.BlockSpec((TM, N), lambda i: (i, 0)),         # bias tile (streamed)
            ],
            out_specs=pl.BlockSpec((TM, HD), lambda i: (i, 0)),
        ),
        compiler_params=pltpu.CompilerParams(
            dimension_semantics=("parallel",),       # v7x: shard dst tiles over 2 TCs
            vmem_limit_bytes=vmem_limit),
    )(z_all, s_t, d_all, bias)

    if merge == "cat":
        return out                         # == torch.cat(head_outs, dim=1): (N, H*D)
    # torch.mean(torch.stack(head_outs)) is a scalar mean over every element.
    return jnp.mean(out)


def _reference(h, W, A, adj, merge="cat"):
    """Pure-JAX reference replicating the PyTorch semantics (f32 throughout)."""
    H_, _, D_ = W.shape
    hi = jax.lax.Precision.HIGHEST
    outs = []
    for hd in range(H_):
        z = jnp.dot(h, W[hd], precision=hi)
        a = A[hd, 0]
        s = jnp.dot(z, a[:D_], precision=hi)
        d = jnp.dot(z, a[D_:], precision=hi)
        e = d[:, None] + s[None, :]
        e = jnp.where(e > 0, e, LEAKY_SLOPE * e)
        e = jnp.where(adj > 0, e, -jnp.inf)
        alpha = jax.nn.softmax(e, axis=1)
        outs.append(jnp.dot(alpha, z, precision=hi))
    if merge == "cat":
        return jnp.concatenate(outs, axis=1)
    return jnp.mean(jnp.stack(outs))


if __name__ == "__main__":
    # Small shapes consistent with the module: N graph nodes, in_dim features,
    # out_dim per head, 4 heads -> H*out_dim = 128 (lane-dense output).
    N, in_dim, out_dim, num_heads = 16, 16, 32, 4

    key = jax.random.PRNGKey(0)
    k_w, k_a, k_h, k_adj = jax.random.split(key, 4)

    # Deterministic xavier_normal_ init with gain = calculate_gain('relu') = sqrt(2).
    gain = math.sqrt(2.0)
    std_fc = gain * math.sqrt(2.0 / (in_dim + out_dim))
    std_attn = gain * math.sqrt(2.0 / (2 * out_dim + 1))

    W = jax.random.normal(k_w, (num_heads, in_dim, out_dim), jnp.float32) * std_fc
    A = jax.random.normal(k_a, (num_heads, 1, 2 * out_dim), jnp.float32) * std_attn
    h = jax.random.normal(k_h, (N, in_dim), jnp.float32)

    # Random dense adjacency with guaranteed self-loops (every dst has >= 1 edge).
    adj = (jax.random.uniform(k_adj, (N, N)) > 0.4).astype(jnp.float32)
    adj = jnp.maximum(adj, jnp.eye(N, dtype=jnp.float32))

    ref = _reference(h, W, A, adj, merge="cat")

    # 1) Exact-precision path (f32 MXU operands), multi-step grid over dst rows.
    out_f32 = multi_head_gat(h, W, A, adj, merge="cat",
                             block_rows=8, mxu_dtype=jnp.float32)
    out_f32 = jax.block_until_ready(out_f32)
    assert out_f32.shape == (N, num_heads * out_dim)
    assert jnp.allclose(out_f32, ref, atol=2e-4, rtol=2e-4), "f32 path mismatch vs reference"

    # 2) Default perf path (bf16 MXU operands, f32 softmax/accumulate); tolerance
    #    accounts for bf16 rounding of the matmul operands.
    out_bf16 = multi_head_gat(h, W, A, adj, merge="cat")
    out_bf16 = jax.block_until_ready(out_bf16)
    assert out_bf16.shape == (N, num_heads * out_dim)
    assert jnp.allclose(out_bf16, ref, atol=5e-2, rtol=5e-2), "bf16 path mismatch vs reference"

    print("KERNEL_OK")
</pallas_src>

<mosaic_0001>
module attributes {stable_mosaic.version = 11 : i64} {
  func.func @_gat_project_kernel(%arg0: memref<16x16xf32, #tpu.memory_space<vmem>>, %arg1: memref<16x128xf32, #tpu.memory_space<vmem>>, %arg2: memref<128x4xf32, #tpu.memory_space<vmem>>, %arg3: memref<128x4xf32, #tpu.memory_space<vmem>>, %arg4: memref<16x128xf32, #tpu.memory_space<vmem>>, %arg5: memref<16x4xf32, #tpu.memory_space<vmem>>, %arg6: memref<16x4xf32, #tpu.memory_space<vmem>>) attributes {dimension_semantics = [], scalar_prefetch = 0 : i64, scratch_operands = 0 : i64, tpu.core_type = #tpu.core_type<tc>} {
    %c0 = arith.constant 0 : index
    %c0_0 = arith.constant 0 : index
    %0 = vector.load %arg0[%c0, %c0_0] : memref<16x16xf32, #tpu.memory_space<vmem>>, vector<16x16xf32>
    %c0_1 = arith.constant 0 : index
    %c0_2 = arith.constant 0 : index
    %1 = vector.load %arg1[%c0_1, %c0_2] : memref<16x128xf32, #tpu.memory_space<vmem>>, vector<16x128xf32>
    %cst = arith.constant dense<0.000000e+00> : vector<16x128xf32>
    %2 = tpu.matmul %0, %1, %cst {dimension_numbers = #tpu.dot_dimension_numbers<[1], [0], [0], [1], [0, 0, 1, 1], [], []>} : vector<16x16xf32>, vector<16x128xf32>, vector<16x128xf32> -> vector<16x128xf32>
    %c0_3 = arith.constant 0 : index
    %c0_4 = arith.constant 0 : index
    %3 = vector.load %arg4[%c0_3, %c0_4] : memref<16x128xf32, #tpu.memory_space<vmem>>, vector<16x128xf32>
    tpu.vector_store %arg4[%c0_3, %c0_4], %2 {strides = array<i32>} : memref<16x128xf32, #tpu.memory_space<vmem>>, vector<16x128xf32>,
    %c0_5 = arith.constant 0 : index
    %c0_6 = arith.constant 0 : index
    %4 = vector.load %arg2[%c0_5, %c0_6] : memref<128x4xf32, #tpu.memory_space<vmem>>, vector<128x4xf32>
    %cst_7 = arith.constant dense<0.000000e+00> : vector<16x4xf32>
    %5 = tpu.matmul %2, %4, %cst_7 {dimension_numbers = #tpu.dot_dimension_numbers<[1], [0], [0], [1], [0, 0, 1, 1], [], []>} : vector<16x128xf32>, vector<128x4xf32>, vector<16x4xf32> -> vector<16x4xf32>
    %c0_8 = arith.constant 0 : index
    %c0_9 = arith.constant 0 : index
    %6 = vector.load %arg5[%c0_8, %c0_9] : memref<16x4xf32, #tpu.memory_space<vmem>>, vector<16x4xf32>
    tpu.vector_store %arg5[%c0_8, %c0_9], %5 {strides = array<i32>} : memref<16x4xf32, #tpu.memory_space<vmem>>, vector<16x4xf32>,
    %c0_10 = arith.constant 0 : index
    %c0_11 = arith.constant 0 : index
    %7 = vector.load %arg3[%c0_10, %c0_11] : memref<128x4xf32, #tpu.memory_space<vmem>>, vector<128x4xf32>
    %cst_12 = arith.constant dense<0.000000e+00> : vector<16x4xf32>
    %8 = tpu.matmul %2, %7, %cst_12 {dimension_numbers = #tpu.dot_dimension_numbers<[1], [0], [0], [1], [0, 0, 1, 1], [], []>} : vector<16x128xf32>, vector<128x4xf32>, vector<16x4xf32> -> vector<16x4xf32>
    %c0_13 = arith.constant 0 : index
    %c0_14 = arith.constant 0 : index
    %9 = vector.load %arg6[%c0_13, %c0_14] : memref<16x4xf32, #tpu.memory_space<vmem>>, vector<16x4xf32>
    tpu.vector_store %arg6[%c0_13, %c0_14], %8 {strides = array<i32>} : memref<16x4xf32, #tpu.memory_space<vmem>>, vector<16x4xf32>,
    return
  }
}

</mosaic_0001>

<llo_original>
// kernel: tpu_custom_call.1
$region0: #{tpu_custom_call.1}
  #allocation0 [shape = 'u32[]', space=smem, size = 0x4, offset = 0x4, fixed_abs, tag = 'smem constant byte address 0x4 - core index']
  #allocation1 [shape = 'u32[144,128]{1,0:T(1,128)}', space=vmem, size = 0x12000, scoped, tag = 'internal scratch']
  %s0 = inlined_call_operand.vmem [shape: f32[16,16], index: 0, kind: input, shape index: {}]
  %s1 = inlined_call_operand.vmem [shape: f32[16,128], index: 1, kind: input, shape index: {}]
  %s2 = inlined_call_operand.vmem [shape: f32[128,4], index: 2, kind: input, shape index: {}]
  %s3 = inlined_call_operand.vmem [shape: f32[128,4], index: 3, kind: input, shape index: {}]
  %s4 = inlined_call_operand.hbm [shape: f32[16,128], index: 4, kind: output, shape index: {0}]
  %s5 = inlined_call_operand.vmem [shape: f32[16,4], index: 5, kind: output, shape index: {1}]
  %s6 = inlined_call_operand.vmem [shape: f32[16,4], index: 6, kind: output, shape index: {2}]
  %7 = xla_tuple %s4, %s5, %s6
  %s8 = sld [smem:[#allocation0]]
  $region42: #{tpu_custom_call.1} parent=0
    _
  %s10 = ssub.s32 1, %s8
  %s11 = scalar_select 0, %s10, %s8
  $region1: #{tpu_custom_call.1} parent=0
    #allocation2 [shape = 'u8[8192]{0}', space=vmem, size = 0x2000, scoped, tag = 'output window, operand 0, single buffered']
    #allocation3 [shape = 's32[1]{0}', space=sflag, size = 0x4, scoped, tag = 'scoped memory for tpu_custom_call.1']
    %12 = vsyncpa [#allocation3], 0
    // Predicated region
    $region2: #{tpu_custom_call.1} parent=1 // pred_check
      _
    $region3: #{tpu_custom_call.1} parent=1 // pred_check_branch
      %14 = sbr.rel (0) target = $region5
    $region4: #{tpu_custom_call.1} parent=1 // pred_region
      _
    $region5: #{tpu_custom_call.1} parent=1 // pred_fallthru
      _
    // Predicated region
    $region6: #{tpu_custom_call.1} parent=1 // pred_check
      _
    $region7: #{tpu_custom_call.1} parent=1 // pred_check_branch
      %16 = sbr.rel (0) target = $region9
    $region8: #{tpu_custom_call.1} parent=1 // pred_region
      _
    $region9: #{tpu_custom_call.1} parent=1 // pred_fallthru
      _
    // Predicated region
    $region10: #{tpu_custom_call.1} parent=1 // pred_check
      _
    $region11: #{tpu_custom_call.1} parent=1 // pred_check_branch
      %18 = sbr.rel (0) target = $region13
    $region12: #{tpu_custom_call.1} parent=1 // pred_region
      _
    $region13: #{tpu_custom_call.1} parent=1 // pred_fallthru
      _
    // Predicated region
    $region14: #{tpu_custom_call.1} parent=1 // pred_check
      _
    $region15: #{tpu_custom_call.1} parent=1 // pred_check_branch
      %20 = sbr.rel (0) target = $region17
    $region16: #{tpu_custom_call.1} parent=1 // pred_region
      _
    $region17: #{tpu_custom_call.1} parent=1 // pred_fallthru
      _
    %v21 = vld [vmem:[%s0] sm:$0xff]
    %v22 = vld [vmem:[%s0 + $0x8] sm:$0xff]
    %v23 = vld [vmem:[%s1] sm:$0xff]
    %v24 = vld [vmem:[%s1 + $0x8] sm:$0xff]
    %vm25 = vcmask 130048
    %v27 = vsel %vm25, %v21, 0
    %v30 = vsel %vm25, %v22, 0
    %32 = vmatprep.subr.mxu0 0.0
    %33 = vmatpush1.msra.mxu0 %v23
    %34 = vmatprep.subr.mxu0 0.0
    %35 = vmatpush1.msra.mxu0 %v24
    %36 = vmatprep.subr.mxu0 0.0
    %37 = vmatpush1.msra.mxu0 0.0
    %38 = vmatprep.subr.mxu0 0.0
    %39 = vmatpush1.msra.mxu0 0.0
    %40 = vmatprep.subr.mxu0 0.0
    %41 = vmatpush1.msra.mxu0 0.0
    %42 = vmatprep.subr.mxu0 0.0
    %43 = vmatpush1.msra.mxu0 0.0
    %44 = vmatprep.subr.mxu0 0.0
    %45 = vmatpush1.msra.mxu0 0.0
    %46 = vmatprep.subr.mxu0 0.0
    %47 = vmatpush1.msra.mxu0 0.0
    %48 = vmatprep.subr.mxu0 0.0
    %49 = vmatpush1.msra.mxu0 0.0
    %50 = vmatprep.subr.mxu0 0.0
    %51 = vmatpush1.msra.mxu0 0.0
    %52 = vmatprep.subr.mxu0 0.0
    %53 = vmatpush1.msra.mxu0 0.0
    %54 = vmatprep.subr.mxu0 0.0
    %55 = vmatpush1.msra.mxu0 0.0
    %56 = vmatprep.subr.mxu0 0.0
    %57 = vmatpush1.msra.mxu0 0.0
    %58 = vmatprep.subr.mxu0 0.0
    %59 = vmatpush1.msra.mxu0 0.0
    %60 = vmatprep.subr.mxu0 0.0
    %61 = vmatpush1.msra.mxu0 0.0
    %62 = vmatprep.subr.mxu0 0.0
    %63 = vmatpush1.msra.mxu0 0.0
    %64 = vmatprep.subr.mxu0 0.0
    %65 = vmatpush1.msra.mxu0 0.0
    %66 = vmatprep.subr.mxu0 0.0
    %67 = vmatpush1.msra.mxu0 0.0
    %68 = vmatprep.subr.mxu0 0.0
    %69 = vmatpush1.msra.mxu0 0.0
    %70 = vmatprep.subr.mxu0 0.0
    %71 = vmatpush1.msra.mxu0 0.0
    %72 = vmatprep.subr.mxu0 0.0
    %73 = vmatpush1.msra.mxu0 0.0
    %74 = vmatprep.subr.mxu0 0.0
    %75 = vmatpush1.msra.mxu0 0.0
    %76 = vmatprep.subr.mxu0 0.0
    %77 = vmatpush1.msra.mxu0 0.0
    %78 = vmatprep.subr.mxu0 0.0
    %79 = vmatpush1.msra.mxu0 0.0
    %80 = vmatprep.subr.mxu0 0.0
    %81 = vmatpush1.msra.mxu0 0.0
    %82 = vmatprep.subr.mxu0 0.0
    %83 = vmatpush1.msra.mxu0 0.0
    %84 = vmatprep.subr.mxu0 0.0
    %85 = vmatpush1.msra.mxu0 0.0
    %86 = vmatprep.subr.mxu0 0.0
    %87 = vmatpush1.msra.mxu0 0.0
    %88 = vmatprep.subr.mxu0 0.0
    %89 = vmatpush1.msra.mxu0 0.0
    %90 = vmatprep.subr.mxu0 0.0
    %91 = vmatpush1.msra.mxu0 0.0
    %92 = vmatprep.subr.mxu0 0.0
    %93 = vmatpush1.msra.mxu0 0.0
    %94 = vmatprep.subr.mxu0 0.0
    %95 = vmatpush1.msra.mxu0 0.0
    %96 = vmatprep.mubr.f32.mxu0 0.0
    %97 = vmatmul.mubr.f32.gmra.mrb[0].mxu0 %v27
    %v98 = vpop.f32.mrb[0].mxu0
    %v99 = vadd.f32 0.0, %v98
    %v100 = vpop.f32.mrb[0].mxu0
    %101 = vmatprep.mubr.f32.mxu0 0.0
    %102 = vmatmul.mubr.f32.gmra.mrb[0].mxu0 %v30
    %v103 = vpop.f32.mrb[0].mxu0
    %v104 = vadd.f32 0.0, %v103
    %v105 = vpop.f32.mrb[0].mxu0
    %106 = vdwg.mxu0
    %107 = vst [vmem:[#allocation2] sm:$0xff] %v99
    %108 = vst [vmem:[#allocation2 + $0x8] sm:$0xff] %v104
    %v109 = vld [vmem:[%s2] sm:$0xff]
    %v110 = vld [vmem:[%s2 + $0x8] sm:$0xff]
    %v111 = vld [vmem:[%s2 + $0x10] sm:$0xff]
    %v112 = vld [vmem:[%s2 + $0x18] sm:$0xff]
    %v113 = vld [vmem:[%s2 + $0x20] sm:$0xff]
    %v114 = vld [vmem:[%s2 + $0x28] sm:$0xff]
    %v115 = vld [vmem:[%s2 + $0x30] sm:$0xff]
    %v116 = vld [vmem:[%s2 + $0x38] sm:$0xff]
    %v117 = vld [vmem:[%s2 + $0x40] sm:$0xff]
    %v118 = vld [vmem:[%s2 + $0x48] sm:$0xff]
    %v119 = vld [vmem:[%s2 + $0x50] sm:$0xff]
    %v120 = vld [vmem:[%s2 + $0x58] sm:$0xff]
    %v121 = vld [vmem:[%s2 + $0x60] sm:$0xff]
    %v122 = vld [vmem:[%s2 + $0x68] sm:$0xff]
    %v123 = vld [vmem:[%s2 + $0x70] sm:$0xff]
    %v124 = vld [vmem:[%s2 + $0x78] sm:$0xff]
    %125 = vmatprep.subr.mxu0 0.0
    %126 = vmatpush1.msra.mxu0 %v109
    %127 = vmatprep.subr.mxu0 0.0
    %128 = vmatpush1.msra.mxu0 %v110
    %129 = vmatprep.subr.mxu0 0.0
    %130 = vmatpush1.msra.mxu0 %v111
    %131 = vmatprep.subr.mxu0 0.0
    %132 = vmatpush1.msra.mxu0 %v112
    %133 = vmatprep.subr.mxu0 0.0
    %134 = vmatpush1.msra.mxu0 %v113
    %135 = vmatprep.subr.mxu0 0.0
    %136 = vmatpush1.msra.mxu0 %v114
    %137 = vmatprep.subr.mxu0 0.0
    %138 = vmatpush1.msra.mxu0 %v115
    %139 = vmatprep.subr.mxu0 0.0
    %140 = vmatpush1.msra.mxu0 %v116
    %141 = vmatprep.subr.mxu0 0.0
    %142 = vmatpush1.msra.mxu0 %v117
    %143 = vmatprep.subr.mxu0 0.0
    %144 = vmatpush1.msra.mxu0 %v118
    %145 = vmatprep.subr.mxu0 0.0
    %146 = vmatpush1.msra.mxu0 %v119
    %147 = vmatprep.subr.mxu0 0.0
    %148 = vmatpush1.msra.mxu0 %v120
    %149 = vmatprep.subr.mxu0 0.0
    %150 = vmatpush1.msra.mxu0 %v121
    %151 = vmatprep.subr.mxu0 0.0
    %152 = vmatpush1.msra.mxu0 %v122
    %153 = vmatprep.subr.mxu0 0.0
    %154 = vmatpush1.msra.mxu0 %v123
    %155 = vmatprep.subr.mxu0 0.0
    %156 = vmatpush1.msra.mxu0 %v124
    %157 = vmatprep.subr.mxu0 0.0
    %158 = vmatpush1.msra.mxu0 0.0
    %159 = vmatprep.subr.mxu0 0.0
    %160 = vmatpush1.msra.mxu0 0.0
    %161 = vmatprep.subr.mxu0 0.0
    %162 = vmatpush1.msra.mxu0 0.0
    %163 = vmatprep.subr.mxu0 0.0
    %164 = vmatpush1.msra.mxu0 0.0
    %165 = vmatprep.subr.mxu0 0.0
    %166 = vmatpush1.msra.mxu0 0.0
    %167 = vmatprep.subr.mxu0 0.0
    %168 = vmatpush1.msra.mxu0 0.0
    %169 = vmatprep.subr.mxu0 0.0
    %170 = vmatpush1.msra.mxu0 0.0
    %171 = vmatprep.subr.mxu0 0.0
    %172 = vmatpush1.msra.mxu0 0.0
    %173 = vmatprep.subr.mxu0 0.0
    %174 = vmatpush1.msra.mxu0 0.0
    %175 = vmatprep.subr.mxu0 0.0
    %176 = vmatpush1.msra.mxu0 0.0
    %177 = vmatprep.subr.mxu0 0.0
    %178 = vmatpush1.msra.mxu0 0.0
    %179 = vmatprep.subr.mxu0 0.0
    %180 = vmatpush1.msra.mxu0 0.0
    %181 = vmatprep.subr.mxu0 0.0
    %182 = vmatpush1.msra.mxu0 0.0
    %183 = vmatprep.subr.mxu0 0.0
    %184 = vmatpush1.msra.mxu0 0.0
    %185 = vmatprep.subr.mxu0 0.0
    %186 = vmatpush1.msra.mxu0 0.0
    %187 = vmatprep.subr.mxu0 0.0
    %188 = vmatpush1.msra.mxu0 0.0
    %189 = vmatprep.mubr.f32.mxu0 0.0
    %190 = vmatmul.mubr.f32.gmra.mrb[0].mxu0 %v99
    %v191 = vpop.f32.mrb[0].mxu0
    %v192 = vadd.f32 0.0, %v191
    %v193 = vpop.f32.mrb[0].mxu0
    %194 = vmatprep.mubr.f32.mxu0 0.0
    %195 = vmatmul.mubr.f32.gmra.mrb[0].mxu0 %v104
    %v196 = vpop.f32.mrb[0].mxu0
    %v197 = vadd.f32 0.0, %v196
    %v198 = vpop.f32.mrb[0].mxu0
    %199 = vdwg.mxu0
    %vm200 = vcmask 31744
    %201 = vst.msk [vmem:[%s5] sm:$0xff] %vm200, %v192
    %202 = vst.msk [vmem:[%s5 + $0x8] sm:$0xff] %vm200, %v197
    %v203 = vld [vmem:[%s3] sm:$0xff]
    %v204 = vld [vmem:[%s3 + $0x8] sm:$0xff]
    %v205 = vld [vmem:[%s3 + $0x10] sm:$0xff]
    %v206 = vld [vmem:[%s3 + $0x18] sm:$0xff]
    %v207 = vld [vmem:[%s3 + $0x20] sm:$0xff]
    %v208 = vld [vmem:[%s3 + $0x28] sm:$0xff]
    %v209 = vld [vmem:[%s3 + $0x30] sm:$0xff]
    %v210 = vld [vmem:[%s3 + $0x38] sm:$0xff]
    %v211 = vld [vmem:[%s3 + $0x40] sm:$0xff]
    %v212 = vld [vmem:[%s3 + $0x48] sm:$0xff]
    %v213 = vld [vmem:[%s3 + $0x50] sm:$0xff]
    %v214 = vld [vmem:[%s3 + $0x58] sm:$0xff]
    %v215 = vld [vmem:[%s3 + $0x60] sm:$0xff]
    %v216 = vld [vmem:[%s3 + $0x68] sm:$0xff]
    %v217 = vld [vmem:[%s3 + $0x70] sm:$0xff]
    %v218 = vld [vmem:[%s3 + $0x78] sm:$0xff]
    %219 = vmatprep.subr.mxu0 0.0
    %220 = vmatpush1.msra.mxu0 %v203
    %221 = vmatprep.subr.mxu0 0.0
    %222 = vmatpush1.msra.mxu0 %v204
    %223 = vmatprep.subr.mxu0 0.0
    %224 = vmatpush1.msra.mxu0 %v205
    %225 = vmatprep.subr.mxu0 0.0
    %226 = vmatpush1.msra.mxu0 %v206
    %227 = vmatprep.subr.mxu0 0.0
    %228 = vmatpush1.msra.mxu0 %v207
    %229 = vmatprep.subr.mxu0 0.0
    %230 = vmatpush1.msra.mxu0 %v208
    %231 = vmatprep.subr.mxu0 0.0
    %232 = vmatpush1.msra.mxu0 %v209
    %233 = vmatprep.subr.mxu0 0.0
    %234 = vmatpush1.msra.mxu0 %v210
    %235 = vmatprep.subr.mxu0 0.0
    %236 = vmatpush1.msra.mxu0 %v211
    %237 = vmatprep.subr.mxu0 0.0
    %238 = vmatpush1.msra.mxu0 %v212
    %239 = vmatprep.subr.mxu0 0.0
    %240 = vmatpush1.msra.mxu0 %v213
    %241 = vmatprep.subr.mxu0 0.0
    %242 = vmatpush1.msra.mxu0 %v214
    %243 = vmatprep.subr.mxu0 0.0
    %244 = vmatpush1.msra.mxu0 %v215
    %245 = vmatprep.subr.mxu0 0.0
    %246 = vmatpush1.msra.mxu0 %v216
    %247 = vmatprep.subr.mxu0 0.0
    %248 = vmatpush1.msra.mxu0 %v217
    %249 = vmatprep.subr.mxu0 0.0
    %250 = vmatpush1.msra.mxu0 %v218
    %251 = vmatprep.subr.mxu0 0.0
    %252 = vmatpush1.msra.mxu0 0.0
    %253 = vmatprep.subr.mxu0 0.0
    %254 = vmatpush1.msra.mxu0 0.0
    %255 = vmatprep.subr.mxu0 0.0
    %256 = vmatpush1.msra.mxu0 0.0
    %257 = vmatprep.subr.mxu0 0.0
    %258 = vmatpush1.msra.mxu0 0.0
    %259 = vmatprep.subr.mxu0 0.0
    %260 = vmatpush1.msra.mxu0 0.0
    %261 = vmatprep.subr.mxu0 0.0
    %262 = vmatpush1.msra.mxu0 0.0
    %263 = vmatprep.subr.mxu0 0.0
    %264 = vmatpush1.msra.mxu0 0.0
    %265 = vmatprep.subr.mxu0 0.0
    %266 = vmatpush1.msra.mxu0 0.0
    %267 = vmatprep.subr.mxu0 0.0
    %268 = vmatpush1.msra.mxu0 0.0
    %269 = vmatprep.subr.mxu0 0.0
    %270 = vmatpush1.msra.mxu0 0.0
    %271 = vmatprep.subr.mxu0 0.0
    %272 = vmatpush1.msra.mxu0 0.0
    %273 = vmatprep.subr.mxu0 0.0
    %274 = vmatpush1.msra.mxu0 0.0
    %275 = vmatprep.subr.mxu0 0.0
    %276 = vmatpush1.msra.mxu0 0.0
    %277 = vmatprep.subr.mxu0 0.0
    %278 = vmatpush1.msra.mxu0 0.0
    %279 = vmatprep.subr.mxu0 0.0
    %280 = vmatpush1.msra.mxu0 0.0
    %281 = vmatprep.subr.mxu0 0.0
    %282 = vmatpush1.msra.mxu0 0.0
    %283 = vmatprep.mubr.f32.mxu0 0.0
    %284 = vmatmul.mubr.f32.gmra.mrb[0].mxu0 %v99
    %v285 = vpop.f32.mrb[0].mxu0
    %v286 = vadd.f32 0.0, %v285
    %v287 = vpop.f32.mrb[0].mxu0
    %288 = vmatprep.mubr.f32.mxu0 0.0
    %289 = vmatmul.mubr.f32.gmra.mrb[0].mxu0 %v104
    %v290 = vpop.f32.mrb[0].mxu0
    %v291 = vadd.f32 0.0, %v290
    %v292 = vpop.f32.mrb[0].mxu0
    %293 = vdwg.mxu0
    %294 = vst.msk [vmem:[%s6] sm:$0xff] %vm200, %v286
    %295 = vst.msk [vmem:[%s6 + $0x8] sm:$0xff] %vm200, %v291
    // Predicated region
    $region18: #{tpu_custom_call.1} parent=1 // pred_check
      _
    $region19: #{tpu_custom_call.1} parent=1 // pred_check_branch
      %297 = sbr.rel (0) target = $region21
    $region20: #{tpu_custom_call.1} parent=1 // pred_region
      %s299 = ssub.s32 256, 256
      %300 = vsyncadd [#allocation3], %s299
      %s301 = sshll.u32 [#allocation2], 4
      %s302 = int_to_ptr.vmem [resolvable:$true] %s301
      %307 = dma.vmem_to_hbm [thread:$0]  %s302, 256, %s4, [#allocation3], 128, 128, 8
    $region21: #{tpu_custom_call.1} parent=1 // pred_fallthru
      _
    // Predicated region
    $region22: #{tpu_custom_call.1} parent=1 // pred_check
      _
    $region23: #{tpu_custom_call.1} parent=1 // pred_check_branch
      %309 = sbr.rel (0) target = $region25
    $region24: #{tpu_custom_call.1} parent=1 // pred_region
      _
    $region25: #{tpu_custom_call.1} parent=1 // pred_fallthru
      _
    // Predicated region
    $region26: #{tpu_custom_call.1} parent=1 // pred_check
      _
    $region27: #{tpu_custom_call.1} parent=1 // pred_check_branch
      %311 = sbr.rel (0) target = $region29
    $region28: #{tpu_custom_call.1} parent=1 // pred_region
      _
    $region29: #{tpu_custom_call.1} parent=1 // pred_fallthru
      _
    // Predicated region
    $region30: #{tpu_custom_call.1} parent=1 // pred_check
      _
    $region31: #{tpu_custom_call.1} parent=1 // pred_check_branch
      %313 = sbr.rel (0) target = $region33
    $region32: #{tpu_custom_call.1} parent=1 // pred_region
      %314 = dma.done [#allocation3], 256
    $region33: #{tpu_custom_call.1} parent=1 // pred_fallthru
      _
    // Predicated region
    $region34: #{tpu_custom_call.1} parent=1 // pred_check
      _
    $region35: #{tpu_custom_call.1} parent=1 // pred_check_branch
      %316 = sbr.rel (0) target = $region37
    $region36: #{tpu_custom_call.1} parent=1 // pred_region
      _
    $region37: #{tpu_custom_call.1} parent=1 // pred_fallthru
      _
    // Predicated region
    $region38: #{tpu_custom_call.1} parent=1 // pred_check
      _
    $region39: #{tpu_custom_call.1} parent=1 // pred_check_branch
      %318 = sbr.rel (0) target = $region41
    $region40: #{tpu_custom_call.1} parent=1 // pred_region
      _
    $region41: #{tpu_custom_call.1} parent=1 // pred_fallthru
      _
    %319 = vsyncpa [#allocation3], 1

</llo_original>
